<compile_context>
chip_gen: v5e
topology: v5e:2x2
jax: 0.10.0
libtpu: 0.0.40
codegen_flags: <defaults>
</compile_context>

<pallas_src>
import functools

import jax
import jax.numpy as jnp
from jax.experimental import pallas as pl
from jax.experimental.pallas import tpu as pltpu

EPS = 1e-5


# ----------------------------------------------------------------------------
# Host-side (trace-time) construction of the conv-as-matmul operands.
# For a conv (kh x kw, stride s, pad p) + folded BN on an (H, W, Cin) image:
#   R[i]  (Ho, H)            : R[i][oh, ih] = 1  iff  ih == s*oh + i - p
#   V[i]  (W*Cin, Wo*Cout)   : V[i][iw*Cin+c, ow*Cout+co] = (w*scale)[co,c,i,j]
#                              where iw == s*ow + j - p   (zero otherwise)
#   b_row (1, Wo*Cout)       : folded BN bias tiled across the output width.
# Out-of-range source rows/cols simply have all-zero R/V entries == zero pad.
# ----------------------------------------------------------------------------
def _conv_bn_operands(p, h_in, w_in, stride, pad):
    w = p["w"]                                   # (Cout, Cin, kh, kw)
    cout, cin, kh, kw = w.shape
    h_out = (h_in + 2 * pad - kh) // stride + 1
    w_out = (w_in + 2 * pad - kw) // stride + 1

    scale = p["gamma"] / jnp.sqrt(p["var"] + EPS)
    bias = p["beta"] - p["mean"] * scale
    wf = w * scale[:, None, None, None]          # BN scale folded into weights

    rows_in = jnp.arange(h_in)
    cols_in = jnp.arange(w_in)
    r_list, v_list = [], []
    for i in range(kh):
        src_rows = stride * jnp.arange(h_out) + i - pad
        r_list.append((rows_in[None, :] == src_rows[:, None]).astype(jnp.bfloat16))
        v = jnp.zeros((w_in * cin, w_out * cout), jnp.float32)
        for j in range(kw):
            src_cols = stride * jnp.arange(w_out) + j - pad
            m = (cols_in[:, None] == src_cols[None, :]).astype(jnp.float32)
            v = v + jnp.kron(m, wf[:, :, i, j].T)        # (W*Cin, Wo*Cout)
        v_list.append(v.astype(jnp.bfloat16))

    r = jnp.stack(r_list)                                # (kh, Ho, H)
    v = jnp.stack(v_list)                                # (kh, W*Cin, Wo*Cout)
    b_row = jnp.tile(bias, w_out).reshape(1, w_out * cout).astype(jnp.float32)
    return r, v, b_row, (h_out, w_out, cout)


# ----------------------------------------------------------------------------
# Fused BasicBlock kernel: one image per grid step, everything stays in VMEM.
# ----------------------------------------------------------------------------
def _basic_block_kernel(x_ref, r1_ref, v1_ref, b1_ref, r2_ref, v2_ref, b2_ref,
                        *rest, skip):
    if skip:
        rd_ref, vd_ref, o_ref = rest
    else:
        (o_ref,) = rest

    x32 = x_ref[0]                         # (H, W*Cin)   f32 (exact residual)
    xb = x32.astype(jnp.bfloat16)          # bf16 operand for the MXU

    def conv(inp_bf16, r_ref, v_ref):
        acc = None
        for t in range(r_ref.shape[0]):    # kh taps, fully unrolled
            rows = jnp.dot(r_ref[t], inp_bf16,
                           preferred_element_type=jnp.float32)     # row select
            part = jnp.dot(rows.astype(jnp.bfloat16), v_ref[t],
                           preferred_element_type=jnp.float32)     # weights
            acc = part if acc is None else acc + part
        return acc                          # f32 (Ho, Wo*Cout)

    # conv1 + BN + ReLU (f32 epilogue), then bf16 for the next MXU stage.
    h1 = jnp.maximum(conv(xb, r1_ref, v1_ref) + b1_ref[...], 0.0)
    # conv2 + BN (downsample-BN bias already folded into b2 when skip).
    out = conv(h1.astype(jnp.bfloat16), r2_ref, v2_ref) + b2_ref[...]
    # residual path
    if skip:
        out = out + conv(xb, rd_ref, vd_ref)       # 1x1 stride-2 conv + BN
    else:
        out = out + x32                            # identity (exact f32)
    o_ref[0] = jnp.maximum(out, 0.0).astype(o_ref.dtype)


def _const_spec(a):
    """Grid-invariant full-array block (fetched once, kept in VMEM)."""
    zero = (0,) * a.ndim
    return pl.BlockSpec(a.shape, lambda b: zero)


def _pair_flops(ho, h_in, wc_in, wc_out):
    return 2 * ho * h_in * wc_in + 2 * ho * wc_in * wc_out


# ----------------------------------------------------------------------------
# BasicBlock forward (NHWC inside; NCHW at the boundary like PyTorch).
# ----------------------------------------------------------------------------
@functools.partial(jax.jit, static_argnames=("skip_connection",))
def basic_block_forward(x_nchw, params, skip_connection):
    n, cin, H, W = x_nchw.shape
    # NCHW -> (N, H, W*Cin): rows = image rows, lanes = (col, channel).
    x2d = jnp.transpose(x_nchw, (0, 2, 3, 1)).reshape(n, H, W * cin)
    x2d = x2d.astype(jnp.float32)

    # Weight-only operands (would be precomputed once in a real deployment).
    r1, v1, b1, (h1, w1, c1) = _conv_bn_operands(params["conv1"], H, W,
                                                 stride=1, pad=1)
    s2 = 2 if skip_connection else 1
    r2, v2, b2, (h2, w2, c2) = _conv_bn_operands(params["conv2"], h1, w1,
                                                 stride=s2, pad=1)

    extra_bytes = 0
    if skip_connection:
        rd, vd, bd, (hd, wd, cd) = _conv_bn_operands(params["down"], H, W,
                                                     stride=2, pad=0)
        assert (hd, wd, cd) == (h2, w2, c2)
        b2 = b2 + bd                       # fold downsample BN bias into b2
        extra_bytes = 2 * (rd.size + vd.size)
    else:
        assert (h2, w2, c2) == (H, W, cin)  # identity add needs matching dims

    args = [x2d, r1, v1, b1, r2, v2, b2]
    in_specs = [pl.BlockSpec((1, H, W * cin), lambda b: (b, 0, 0)),
                _const_spec(r1), _const_spec(v1), _const_spec(b1),
                _const_spec(r2), _const_spec(v2), _const_spec(b2)]
    if skip_connection:
        args += [rd, vd]
        in_specs += [_const_spec(rd), _const_spec(vd)]

    per_img = (3 * _pair_flops(h1, H, W * cin, w1 * c1)
               + 3 * _pair_flops(h2, h1, w1 * c1, w2 * c2))
    if skip_connection:
        per_img += _pair_flops(h2, H, W * cin, w2 * c2)
    flops = n * per_img
    bytes_accessed = (4 * x2d.size
                      + 2 * (r1.size + v1.size + r2.size + v2.size)
                      + 4 * (b1.size + b2.size)
                      + 4 * n * h2 * w2 * c2 + extra_bytes)

    out2d = pl.pallas_call(
        functools.partial(_basic_block_kernel, skip=skip_connection),
        out_shape=jax.ShapeDtypeStruct((n, h2, w2 * c2), jnp.float32),
        grid=(n,),
        in_specs=in_specs,
        out_specs=pl.BlockSpec((1, h2, w2 * c2), lambda b: (b, 0, 0)),
        compiler_params=pltpu.CompilerParams(
            dimension_semantics=("parallel",),
            vmem_limit_bytes=32 * 1024 * 1024),
        cost_estimate=pl.CostEstimate(
            flops=flops, transcendentals=0, bytes_accessed=bytes_accessed),
    )(*args)

    out = out2d.reshape(n, h2, w2, c2)
    return jnp.transpose(out, (0, 3, 1, 2))     # NHWC -> NCHW


# ----------------------------------------------------------------------------
# Deterministic parameter construction.
# ----------------------------------------------------------------------------
def make_conv_bn_params(key, cin, cout, k):
    k1, k2, k3, k4, k5 = jax.random.split(key, 5)
    return dict(
        w=0.1 * jax.random.normal(k1, (cout, cin, k, k), jnp.float32),
        gamma=1.0 + 0.1 * jax.random.normal(k2, (cout,), jnp.float32),
        beta=0.1 * jax.random.normal(k3, (cout,), jnp.float32),
        mean=0.1 * jax.random.normal(k4, (cout,), jnp.float32),
        var=jnp.abs(jax.random.normal(k5, (cout,), jnp.float32)) + 0.5,
    )


def make_basic_block_params(key, cin, cout, skip_connection):
    k1, k2, k3 = jax.random.split(key, 3)
    p = dict(
        conv1=make_conv_bn_params(k1, cin, cout, 3),
        conv2=make_conv_bn_params(k2, cout, cout, 3),
    )
    if skip_connection:
        p["down"] = make_conv_bn_params(k3, cin, cout, 1)
    return p


# ----------------------------------------------------------------------------
# Pure-JAX references for validation.
#   match_bf16=True rounds the conv operands to bf16 (same as the kernel) so a
#   tight tolerance applies; match_bf16=False is the exact f32 module math.
# ----------------------------------------------------------------------------
def _ref_conv_bn(x_nhwc, p, stride, pad, relu, match_bf16=False):
    scale = p["gamma"] / jnp.sqrt(p["var"] + EPS)
    bias = p["beta"] - p["mean"] * scale
    w_hwio = jnp.transpose(p["w"], (2, 3, 1, 0)) * scale
    if match_bf16:
        x_nhwc = x_nhwc.astype(jnp.bfloat16).astype(jnp.float32)
        w_hwio = w_hwio.astype(jnp.bfloat16).astype(jnp.float32)
    y = jax.lax.conv_general_dilated(
        x_nhwc, w_hwio, (stride, stride), ((pad, pad), (pad, pad)),
        dimension_numbers=("NHWC", "HWIO", "NHWC"))
    y = y + bias
    return jnp.maximum(y, 0.0) if relu else y


def _ref_basic_block(x_nchw, params, skip_connection, match_bf16=False):
    x = jnp.transpose(x_nchw, (0, 2, 3, 1))
    out = _ref_conv_bn(x, params["conv1"], 1, 1, True, match_bf16)
    if skip_connection:
        identity = _ref_conv_bn(x, params["down"], 2, 0, False, match_bf16)
        stride2 = 2
    else:
        identity = x
        stride2 = 1
    out = _ref_conv_bn(out, params["conv2"], stride2, 1, False, match_bf16)
    out = jnp.maximum(out + identity, 0.0)
    return jnp.transpose(out, (0, 3, 1, 2))


if __name__ == "__main__":
    key = jax.random.PRNGKey(0)
    kx, kp1, kp2 = jax.random.split(key, 3)

    # Case 1: skip_connection=True, input_dim=4 -> output_dim=8, spatial 16->8.
    x = jax.random.normal(kx, (2, 4, 16, 16), jnp.float32)
    params_skip = make_basic_block_params(kp1, 4, 8, skip_connection=True)
    y_skip = jax.block_until_ready(
        basic_block_forward(x, params_skip, skip_connection=True))
    assert y_skip.shape == (2, 8, 8, 8)
    ref_bf = _ref_basic_block(x, params_skip, True, match_bf16=True)
    ref_f32 = _ref_basic_block(x, params_skip, True, match_bf16=False)
    assert jnp.allclose(y_skip, ref_bf, atol=1e-2, rtol=1e-2)
    assert jnp.allclose(y_skip, ref_f32, atol=5e-2, rtol=5e-2)

    # Case 2: skip_connection=False, input_dim=output_dim=4 (identity = x).
    params_plain = make_basic_block_params(kp2, 4, 4, skip_connection=False)
    y_plain = jax.block_until_ready(
        basic_block_forward(x, params_plain, skip_connection=False))
    assert y_plain.shape == (2, 4, 16, 16)
    ref_bf = _ref_basic_block(x, params_plain, False, match_bf16=True)
    ref_f32 = _ref_basic_block(x, params_plain, False, match_bf16=False)
    assert jnp.allclose(y_plain, ref_bf, atol=1e-2, rtol=1e-2)
    assert jnp.allclose(y_plain, ref_f32, atol=5e-2, rtol=5e-2)

    print("KERNEL_OK")
</pallas_src>

<mosaic_0001>
module attributes {stable_mosaic.version = 11 : i64} {
  func.func @_basic_block_kernel(%arg0: i32, %arg1: memref<1x16x64xf32, #tpu.memory_space<vmem>>, %arg2: memref<3x16x16xbf16, #tpu.memory_space<vmem>>, %arg3: memref<3x64x128xbf16, #tpu.memory_space<vmem>>, %arg4: memref<1x128xf32, #tpu.memory_space<vmem>>, %arg5: memref<3x8x16xbf16, #tpu.memory_space<vmem>>, %arg6: memref<3x128x64xbf16, #tpu.memory_space<vmem>>, %arg7: memref<1x64xf32, #tpu.memory_space<vmem>>, %arg8: memref<1x8x16xbf16, #tpu.memory_space<vmem>>, %arg9: memref<1x64x64xbf16, #tpu.memory_space<vmem>>, %arg10: memref<1x8x64xf32, #tpu.memory_space<vmem>>) attributes {dimension_semantics = [#tpu.dimension_semantics<parallel>], iteration_bounds = array<i64: 2>, scalar_prefetch = 0 : i64, scratch_operands = 0 : i64, tpu.core_type = #tpu.core_type<tc>, window_params = [{transform_indices = @transform_0, window_bounds = array<i64: 1, 16, 64>}, {pipeline_mode = #tpu.pipeline_mode<synchronous>, transform_indices = @transform_1, window_bounds = array<i64: 3, 16, 16>}, {pipeline_mode = #tpu.pipeline_mode<synchronous>, transform_indices = @transform_2, window_bounds = array<i64: 3, 64, 128>}, {pipeline_mode = #tpu.pipeline_mode<synchronous>, transform_indices = @transform_3, window_bounds = array<i64: 1, 128>}, {pipeline_mode = #tpu.pipeline_mode<synchronous>, transform_indices = @transform_4, window_bounds = array<i64: 3, 8, 16>}, {pipeline_mode = #tpu.pipeline_mode<synchronous>, transform_indices = @transform_5, window_bounds = array<i64: 3, 128, 64>}, {pipeline_mode = #tpu.pipeline_mode<synchronous>, transform_indices = @transform_6, window_bounds = array<i64: 1, 64>}, {pipeline_mode = #tpu.pipeline_mode<synchronous>, transform_indices = @transform_7, window_bounds = array<i64: 1, 8, 16>}, {pipeline_mode = #tpu.pipeline_mode<synchronous>, transform_indices = @transform_8, window_bounds = array<i64: 1, 64, 64>}, {transform_indices = @transform_9, window_bounds = array<i64: 1, 8, 64>}]} {
    %c0 = arith.constant 0 : index
    %c0_0 = arith.constant 0 : index
    %c0_1 = arith.constant 0 : index
    %0 = vector.load %arg1[%c0, %c0_0, %c0_1] : memref<1x16x64xf32, #tpu.memory_space<vmem>>, vector<1x16x64xf32>
    %1 = vector.shape_cast %0 : vector<1x16x64xf32> to vector<16x64xf32>
    %2 = arith.truncf %1 : vector<16x64xf32> to vector<16x64xbf16>
    %c0_2 = arith.constant 0 : index
    %c0_3 = arith.constant 0 : index
    %c0_4 = arith.constant 0 : index
    %3 = vector.load %arg2[%c0_2, %c0_3, %c0_4] : memref<3x16x16xbf16, #tpu.memory_space<vmem>>, vector<1x16x16xbf16>
    %4 = vector.shape_cast %3 : vector<1x16x16xbf16> to vector<16x16xbf16>
    %cst = arith.constant dense<0.000000e+00> : vector<16x64xf32>
    %5 = tpu.matmul %4, %2, %cst {dimension_numbers = #tpu.dot_dimension_numbers<[1], [0], [0], [1], [0, 0, 1, 1], [], []>} : vector<16x16xbf16>, vector<16x64xbf16>, vector<16x64xf32> -> vector<16x64xf32>
    %6 = arith.truncf %5 : vector<16x64xf32> to vector<16x64xbf16>
    %c0_5 = arith.constant 0 : index
    %c0_6 = arith.constant 0 : index
    %c0_7 = arith.constant 0 : index
    %7 = vector.load %arg3[%c0_5, %c0_6, %c0_7] : memref<3x64x128xbf16, #tpu.memory_space<vmem>>, vector<1x64x128xbf16>
    %8 = vector.shape_cast %7 : vector<1x64x128xbf16> to vector<64x128xbf16>
    %cst_8 = arith.constant dense<0.000000e+00> : vector<16x128xf32>
    %9 = tpu.matmul %6, %8, %cst_8 {dimension_numbers = #tpu.dot_dimension_numbers<[1], [0], [0], [1], [0, 0, 1, 1], [], []>} : vector<16x64xbf16>, vector<64x128xbf16>, vector<16x128xf32> -> vector<16x128xf32>
    %c1 = arith.constant 1 : index
    %c0_9 = arith.constant 0 : index
    %c0_10 = arith.constant 0 : index
    %10 = vector.load %arg2[%c1, %c0_9, %c0_10] : memref<3x16x16xbf16, #tpu.memory_space<vmem>>, vector<1x16x16xbf16>
    %11 = vector.shape_cast %10 : vector<1x16x16xbf16> to vector<16x16xbf16>
    %cst_11 = arith.constant dense<0.000000e+00> : vector<16x64xf32>
    %12 = tpu.matmul %11, %2, %cst_11 {dimension_numbers = #tpu.dot_dimension_numbers<[1], [0], [0], [1], [0, 0, 1, 1], [], []>} : vector<16x16xbf16>, vector<16x64xbf16>, vector<16x64xf32> -> vector<16x64xf32>
    %13 = arith.truncf %12 : vector<16x64xf32> to vector<16x64xbf16>
    %c1_12 = arith.constant 1 : index
    %c0_13 = arith.constant 0 : index
    %c0_14 = arith.constant 0 : index
    %14 = vector.load %arg3[%c1_12, %c0_13, %c0_14] : memref<3x64x128xbf16, #tpu.memory_space<vmem>>, vector<1x64x128xbf16>
    %15 = vector.shape_cast %14 : vector<1x64x128xbf16> to vector<64x128xbf16>
    %cst_15 = arith.constant dense<0.000000e+00> : vector<16x128xf32>
    %16 = tpu.matmul %13, %15, %cst_15 {dimension_numbers = #tpu.dot_dimension_numbers<[1], [0], [0], [1], [0, 0, 1, 1], [], []>} : vector<16x64xbf16>, vector<64x128xbf16>, vector<16x128xf32> -> vector<16x128xf32>
    %17 = arith.addf %9, %16 : vector<16x128xf32>
    %c2 = arith.constant 2 : index
    %c0_16 = arith.constant 0 : index
    %c0_17 = arith.constant 0 : index
    %18 = vector.load %arg2[%c2, %c0_16, %c0_17] : memref<3x16x16xbf16, #tpu.memory_space<vmem>>, vector<1x16x16xbf16>
    %19 = vector.shape_cast %18 : vector<1x16x16xbf16> to vector<16x16xbf16>
    %cst_18 = arith.constant dense<0.000000e+00> : vector<16x64xf32>
    %20 = tpu.matmul %19, %2, %cst_18 {dimension_numbers = #tpu.dot_dimension_numbers<[1], [0], [0], [1], [0, 0, 1, 1], [], []>} : vector<16x16xbf16>, vector<16x64xbf16>, vector<16x64xf32> -> vector<16x64xf32>
    %21 = arith.truncf %20 : vector<16x64xf32> to vector<16x64xbf16>
    %c2_19 = arith.constant 2 : index
    %c0_20 = arith.constant 0 : index
    %c0_21 = arith.constant 0 : index
    %22 = vector.load %arg3[%c2_19, %c0_20, %c0_21] : memref<3x64x128xbf16, #tpu.memory_space<vmem>>, vector<1x64x128xbf16>
    %23 = vector.shape_cast %22 : vector<1x64x128xbf16> to vector<64x128xbf16>
    %cst_22 = arith.constant dense<0.000000e+00> : vector<16x128xf32>
    %24 = tpu.matmul %21, %23, %cst_22 {dimension_numbers = #tpu.dot_dimension_numbers<[1], [0], [0], [1], [0, 0, 1, 1], [], []>} : vector<16x64xbf16>, vector<64x128xbf16>, vector<16x128xf32> -> vector<16x128xf32>
    %25 = arith.addf %17, %24 : vector<16x128xf32>
    %c0_23 = arith.constant 0 : index
    %c0_24 = arith.constant 0 : index
    %26 = vector.load %arg4[%c0_23, %c0_24] : memref<1x128xf32, #tpu.memory_space<vmem>>, vector<1x128xf32>
    %27 = vector.broadcast %26 : vector<1x128xf32> to vector<16x128xf32>
    %28 = arith.addf %25, %27 : vector<16x128xf32>
    %cst_25 = arith.constant 0.000000e+00 : f32
    %29 = vector.broadcast %cst_25 : f32 to vector<16x128xf32>
    %30 = arith.maximumf %28, %29 : vector<16x128xf32>
    %31 = arith.truncf %30 : vector<16x128xf32> to vector<16x128xbf16>
    %c0_26 = arith.constant 0 : index
    %c0_27 = arith.constant 0 : index
    %c0_28 = arith.constant 0 : index
    %32 = vector.load %arg5[%c0_26, %c0_27, %c0_28] : memref<3x8x16xbf16, #tpu.memory_space<vmem>>, vector<1x8x16xbf16>
    %33 = vector.shape_cast %32 : vector<1x8x16xbf16> to vector<8x16xbf16>
    %cst_29 = arith.constant dense<0.000000e+00> : vector<8x128xf32>
    %34 = tpu.matmul %33, %31, %cst_29 {dimension_numbers = #tpu.dot_dimension_numbers<[1], [0], [0], [1], [0, 0, 1, 1], [], []>} : vector<8x16xbf16>, vector<16x128xbf16>, vector<8x128xf32> -> vector<8x128xf32>
    %35 = arith.truncf %34 : vector<8x128xf32> to vector<8x128xbf16>
    %c0_30 = arith.constant 0 : index
    %c0_31 = arith.constant 0 : index
    %c0_32 = arith.constant 0 : index
    %36 = vector.load %arg6[%c0_30, %c0_31, %c0_32] : memref<3x128x64xbf16, #tpu.memory_space<vmem>>, vector<1x128x64xbf16>
    %37 = vector.shape_cast %36 : vector<1x128x64xbf16> to vector<128x64xbf16>
    %cst_33 = arith.constant dense<0.000000e+00> : vector<8x64xf32>
    %38 = tpu.matmul %35, %37, %cst_33 {dimension_numbers = #tpu.dot_dimension_numbers<[1], [0], [0], [1], [0, 0, 1, 1], [], []>} : vector<8x128xbf16>, vector<128x64xbf16>, vector<8x64xf32> -> vector<8x64xf32>
    %c1_34 = arith.constant 1 : index
    %c0_35 = arith.constant 0 : index
    %c0_36 = arith.constant 0 : index
    %39 = vector.load %arg5[%c1_34, %c0_35, %c0_36] : memref<3x8x16xbf16, #tpu.memory_space<vmem>>, vector<1x8x16xbf16>
    %40 = vector.shape_cast %39 : vector<1x8x16xbf16> to vector<8x16xbf16>
    %cst_37 = arith.constant dense<0.000000e+00> : vector<8x128xf32>
    %41 = tpu.matmul %40, %31, %cst_37 {dimension_numbers = #tpu.dot_dimension_numbers<[1], [0], [0], [1], [0, 0, 1, 1], [], []>} : vector<8x16xbf16>, vector<16x128xbf16>, vector<8x128xf32> -> vector<8x128xf32>
    %42 = arith.truncf %41 : vector<8x128xf32> to vector<8x128xbf16>
    %c1_38 = arith.constant 1 : index
    %c0_39 = arith.constant 0 : index
    %c0_40 = arith.constant 0 : index
    %43 = vector.load %arg6[%c1_38, %c0_39, %c0_40] : memref<3x128x64xbf16, #tpu.memory_space<vmem>>, vector<1x128x64xbf16>
    %44 = vector.shape_cast %43 : vector<1x128x64xbf16> to vector<128x64xbf16>
    %cst_41 = arith.constant dense<0.000000e+00> : vector<8x64xf32>
    %45 = tpu.matmul %42, %44, %cst_41 {dimension_numbers = #tpu.dot_dimension_numbers<[1], [0], [0], [1], [0, 0, 1, 1], [], []>} : vector<8x128xbf16>, vector<128x64xbf16>, vector<8x64xf32> -> vector<8x64xf32>
    %46 = arith.addf %38, %45 : vector<8x64xf32>
    %c2_42 = arith.constant 2 : index
    %c0_43 = arith.constant 0 : index
    %c0_44 = arith.constant 0 : index
    %47 = vector.load %arg5[%c2_42, %c0_43, %c0_44] : memref<3x8x16xbf16, #tpu.memory_space<vmem>>, vector<1x8x16xbf16>
    %48 = vector.shape_cast %47 : vector<1x8x16xbf16> to vector<8x16xbf16>
    %cst_45 = arith.constant dense<0.000000e+00> : vector<8x128xf32>
    %49 = tpu.matmul %48, %31, %cst_45 {dimension_numbers = #tpu.dot_dimension_numbers<[1], [0], [0], [1], [0, 0, 1, 1], [], []>} : vector<8x16xbf16>, vector<16x128xbf16>, vector<8x128xf32> -> vector<8x128xf32>
    %50 = arith.truncf %49 : vector<8x128xf32> to vector<8x128xbf16>
    %c2_46 = arith.constant 2 : index
    %c0_47 = arith.constant 0 : index
    %c0_48 = arith.constant 0 : index
    %51 = vector.load %arg6[%c2_46, %c0_47, %c0_48] : memref<3x128x64xbf16, #tpu.memory_space<vmem>>, vector<1x128x64xbf16>
    %52 = vector.shape_cast %51 : vector<1x128x64xbf16> to vector<128x64xbf16>
    %cst_49 = arith.constant dense<0.000000e+00> : vector<8x64xf32>
    %53 = tpu.matmul %50, %52, %cst_49 {dimension_numbers = #tpu.dot_dimension_numbers<[1], [0], [0], [1], [0, 0, 1, 1], [], []>} : vector<8x128xbf16>, vector<128x64xbf16>, vector<8x64xf32> -> vector<8x64xf32>
    %54 = arith.addf %46, %53 : vector<8x64xf32>
    %c0_50 = arith.constant 0 : index
    %c0_51 = arith.constant 0 : index
    %55 = vector.load %arg7[%c0_50, %c0_51] : memref<1x64xf32, #tpu.memory_space<vmem>>, vector<1x64xf32>
    %56 = vector.broadcast %55 : vector<1x64xf32> to vector<8x64xf32>
    %57 = arith.addf %54, %56 : vector<8x64xf32>
    %c0_52 = arith.constant 0 : index
    %c0_53 = arith.constant 0 : index
    %c0_54 = arith.constant 0 : index
    %58 = vector.load %arg8[%c0_52, %c0_53, %c0_54] : memref<1x8x16xbf16, #tpu.memory_space<vmem>>, vector<1x8x16xbf16>
    %59 = vector.shape_cast %58 : vector<1x8x16xbf16> to vector<8x16xbf16>
    %cst_55 = arith.constant dense<0.000000e+00> : vector<8x64xf32>
    %60 = tpu.matmul %59, %2, %cst_55 {dimension_numbers = #tpu.dot_dimension_numbers<[1], [0], [0], [1], [0, 0, 1, 1], [], []>} : vector<8x16xbf16>, vector<16x64xbf16>, vector<8x64xf32> -> vector<8x64xf32>
    %61 = arith.truncf %60 : vector<8x64xf32> to vector<8x64xbf16>
    %c0_56 = arith.constant 0 : index
    %c0_57 = arith.constant 0 : index
    %c0_58 = arith.constant 0 : index
    %62 = vector.load %arg9[%c0_56, %c0_57, %c0_58] : memref<1x64x64xbf16, #tpu.memory_space<vmem>>, vector<1x64x64xbf16>
    %63 = vector.shape_cast %62 : vector<1x64x64xbf16> to vector<64x64xbf16>
    %cst_59 = arith.constant dense<0.000000e+00> : vector<8x64xf32>
    %64 = tpu.matmul %61, %63, %cst_59 {dimension_numbers = #tpu.dot_dimension_numbers<[1], [0], [0], [1], [0, 0, 1, 1], [], []>} : vector<8x64xbf16>, vector<64x64xbf16>, vector<8x64xf32> -> vector<8x64xf32>
    %65 = arith.addf %57, %64 : vector<8x64xf32>
    %cst_60 = arith.constant 0.000000e+00 : f32
    %66 = vector.broadcast %cst_60 : f32 to vector<8x64xf32>
    %67 = arith.maximumf %65, %66 : vector<8x64xf32>
    %c0_61 = arith.constant 0 : index
    %c0_62 = arith.constant 0 : index
    %c0_63 = arith.constant 0 : index
    %68 = vector.load %arg10[%c0_61, %c0_62, %c0_63] : memref<1x8x64xf32, #tpu.memory_space<vmem>>, vector<1x8x64xf32>
    %69 = vector.shape_cast %68 : vector<1x8x64xf32> to vector<8x64xf32>
    %70 = vector.shape_cast %67 : vector<8x64xf32> to vector<1x8x64xf32>
    tpu.vector_store %arg10[%c0_61, %c0_62, %c0_63], %70 {strides = array<i32>} : memref<1x8x64xf32, #tpu.memory_space<vmem>>, vector<1x8x64xf32>,
    return
  }
  func.func @transform_0(%arg0: i32) -> (i32, i32, i32) {
    %c0_i32 = arith.constant 0 : i32
    %c0_i32_0 = arith.constant 0 : i32
    %c0_i32_1 = arith.constant 0 : i32
    return %arg0, %c0_i32, %c0_i32_0 : i32, i32, i32
  }
  func.func @transform_1(%arg0: i32) -> (i32, i32, i32) {
    %c0_i32 = arith.constant 0 : i32
    %c0_i32_0 = arith.constant 0 : i32
    %c0_i32_1 = arith.constant 0 : i32
    %c0_i32_2 = arith.constant 0 : i32
    return %c0_i32, %c0_i32_0, %c0_i32_1 : i32, i32, i32
  }
  func.func @transform_2(%arg0: i32) -> (i32, i32, i32) {
    %c0_i32 = arith.constant 0 : i32
    %c0_i32_0 = arith.constant 0 : i32
    %c0_i32_1 = arith.constant 0 : i32
    %c0_i32_2 = arith.constant 0 : i32
    return %c0_i32, %c0_i32_0, %c0_i32_1 : i32, i32, i32
  }
  func.func @transform_3(%arg0: i32) -> (i32, i32) {
    %c0_i32 = arith.constant 0 : i32
    %c0_i32_0 = arith.constant 0 : i32
    %c0_i32_1 = arith.constant 0 : i32
    return %c0_i32, %c0_i32_0 : i32, i32
  }
  func.func @transform_4(%arg0: i32) -> (i32, i32, i32) {
    %c0_i32 = arith.constant 0 : i32
    %c0_i32_0 = arith.constant 0 : i32
    %c0_i32_1 = arith.constant 0 : i32
    %c0_i32_2 = arith.constant 0 : i32
    return %c0_i32, %c0_i32_0, %c0_i32_1 : i32, i32, i32
  }
  func.func @transform_5(%arg0: i32) -> (i32, i32, i32) {
    %c0_i32 = arith.constant 0 : i32
    %c0_i32_0 = arith.constant 0 : i32
    %c0_i32_1 = arith.constant 0 : i32
    %c0_i32_2 = arith.constant 0 : i32
    return %c0_i32, %c0_i32_0, %c0_i32_1 : i32, i32, i32
  }
  func.func @transform_6(%arg0: i32) -> (i32, i32) {
    %c0_i32 = arith.constant 0 : i32
    %c0_i32_0 = arith.constant 0 : i32
    %c0_i32_1 = arith.constant 0 : i32
    return %c0_i32, %c0_i32_0 : i32, i32
  }
  func.func @transform_7(%arg0: i32) -> (i32, i32, i32) {
    %c0_i32 = arith.constant 0 : i32
    %c0_i32_0 = arith.constant 0 : i32
    %c0_i32_1 = arith.constant 0 : i32
    %c0_i32_2 = arith.constant 0 : i32
    return %c0_i32, %c0_i32_0, %c0_i32_1 : i32, i32, i32
  }
  func.func @transform_8(%arg0: i32) -> (i32, i32, i32) {
    %c0_i32 = arith.constant 0 : i32
    %c0_i32_0 = arith.constant 0 : i32
    %c0_i32_1 = arith.constant 0 : i32
    %c0_i32_2 = arith.constant 0 : i32
    return %c0_i32, %c0_i32_0, %c0_i32_1 : i32, i32, i32
  }
  func.func @transform_9(%arg0: i32) -> (i32, i32, i32) {
    %c0_i32 = arith.constant 0 : i32
    %c0_i32_0 = arith.constant 0 : i32
    %c0_i32_1 = arith.constant 0 : i32
    return %arg0, %c0_i32, %c0_i32_0 : i32, i32, i32
  }
}

</mosaic_0001>

<llo_original>
// kernel: tile.18
$region0: #{tile.18}
  #allocation0 [shape = 's32[1]{0}', space=sflag, size = 0x4, scoped, tag = 'scoped memory for tile.18']
  %s0 = inlined_call_operand.vmem [shape: f32[8], index: 0, kind: input, shape index: {}]
  %s1 = inlined_call_operand.vmem [shape: f32[16,8], index: 1, kind: output, shape index: {}]
  // Predicated region
  $region2: #{tile.18} parent=0 // pred_check
    _
  $region3: #{tile.18} parent=0 // pred_check_branch
    %3 = sbr.rel (0) target = $region5
  $region4: #{tile.18} parent=0 // pred_region
    _
  $region5: #{tile.18} parent=0 // pred_fallthru
    _
  %v4 = vld [vmem:[%s0] ss:$0 sm:$0xff]
  %5 = vst [vmem:[%s1] sm:$0xff] %v4
  %s6 = scalar_lea.vmem %s1, 8
  %7 = vst [vmem:[%s6] sm:$0xff] %v4

// kernel: tile.19
$region0: #{tile.19}
  %s0 = inlined_call_operand.vmem [shape: f32[16,8], index: 0, kind: input, shape index: {}]
  %s1 = inlined_call_operand.vmem [shape: f32[1,128], index: 1, kind: output, shape index: {}]
  $region1: #{tile.19} parent=0
    #allocation0 [shape = 'u8[4096]{0}', space=vmem, size = 0x1000, scoped, tag = 'scoped mem for output reshape']
    %v2 = vld [vmem:[%s0] sm:$0x1]
    %vm3 = vcmask 64512
    %4 = vst.msk [vmem:[#allocation0] sm:$0x1] %vm3, %v2
    %s5 = scalar_lea.vmem %s0, 15
    %v6 = vld [vmem:[%s5] sm:$0x1]
    %7 = vrot.lane.b32.xlu0 %v6, 120
    %v8 = vpop.permute.xlu0 %7
    %vm9 = vcmask 1048512
    %10 = vst.msk [vmem:[#allocation0] sm:$0x1] %vm9, %v8
    %s11 = scalar_lea.vmem %s0, 14
    %v12 = vld [vmem:[%s11] sm:$0x1]
    %13 = vrot.lane.b32.xlu0 %v12, 112
    %v14 = vpop.permute.xlu0 %13
    %vm15 = vcmask 982912
    %16 = vst.msk [vmem:[#allocation0] sm:$0x1] %vm15, %v14
    %s17 = scalar_lea.vmem %s0, 13
    %v18 = vld [vmem:[%s17] sm:$0x1]
    %19 = vrot.lane.b32.xlu0 %v18, 104
    %v20 = vpop.permute.xlu0 %19
    %vm21 = vcmask 917312
    %22 = vst.msk [vmem:[#allocation0] sm:$0x1] %vm21, %v20
    %s23 = scalar_lea.vmem %s0, 12
    %v24 = vld [vmem:[%s23] sm:$0x1]
    %25 = vrot.lane.b32.xlu0 %v24, 96
    %v26 = vpop.permute.xlu0 %25
    %vm27 = vcmask 851712
    %28 = vst.msk [vmem:[#allocation0] sm:$0x1] %vm27, %v26
    %s29 = scalar_lea.vmem %s0, 11
    %v30 = vld [vmem:[%s29] sm:$0x1]
    %31 = vrot.lane.b32.xlu0 %v30, 88
    %v32 = vpop.permute.xlu0 %31
    %vm33 = vcmask 786112
    %34 = vst.msk [vmem:[#allocation0] sm:$0x1] %vm33, %v32
    %s35 = scalar_lea.vmem %s0, 10
    %v36 = vld [vmem:[%s35] sm:$0x1]
    %37 = vrot.lane.b32.xlu0 %v36, 80
    %v38 = vpop.permute.xlu0 %37
    %vm39 = vcmask 720512
    %40 = vst.msk [vmem:[#allocation0] sm:$0x1] %vm39, %v38
    %s41 = scalar_lea.vmem %s0, 9
    %v42 = vld [vmem:[%s41] sm:$0x1]
    %43 = vrot.lane.b32.xlu0 %v42, 72
    %v44 = vpop.permute.xlu0 %43
    %vm45 = vcmask 654912
    %46 = vst.msk [vmem:[#allocation0] sm:$0x1] %vm45, %v44
    %s47 = scalar_lea.vmem %s0, 8
    %v48 = vld [vmem:[%s47] sm:$0x1]
    %49 = vrot.lane.b32.xlu0 %v48, 64
    %v50 = vpop.permute.xlu0 %49
    %vm51 = vcmask 589312
    %52 = vst.msk [vmem:[#allocation0] sm:$0x1] %vm51, %v50
    %s53 = scalar_lea.vmem %s0, 7
    %v54 = vld [vmem:[%s53] sm:$0x1]
    %55 = vrot.lane.b32.xlu0 %v54, 56
    %v56 = vpop.permute.xlu0 %55
    %vm57 = vcmask 523712
    %58 = vst.msk [vmem:[#allocation0] sm:$0x1] %vm57, %v56
    %s59 = scalar_lea.vmem %s0, 6
    %v60 = vld [vmem:[%s59] sm:$0x1]
    %61 = vrot.lane.b32.xlu0 %v60, 48
    %v62 = vpop.permute.xlu0 %61
    %vm63 = vcmask 458112
    %64 = vst.msk [vmem:[#allocation0] sm:$0x1] %vm63, %v62
    %s65 = scalar_lea.vmem %s0, 5
    %v66 = vld [vmem:[%s65] sm:$0x1]
    %67 = vrot.lane.b32.xlu0 %v66, 40
    %v68 = vpop.permute.xlu0 %67
    %vm69 = vcmask 392512
    %70 = vst.msk [vmem:[#allocation0] sm:$0x1] %vm69, %v68
    %s71 = scalar_lea.vmem %s0, 4
    %v72 = vld [vmem:[%s71] sm:$0x1]
    %73 = vrot.lane.b32.xlu0 %v72, 32
    %v74 = vpop.permute.xlu0 %73
    %vm75 = vcmask 326912
    %76 = vst.msk [vmem:[#allocation0] sm:$0x1] %vm75, %v74
    %s77 = scalar_lea.vmem %s0, 3
    %v78 = vld [vmem:[%s77] sm:$0x1]
    %79 = vrot.lane.b32.xlu0 %v78, 24
    %v80 = vpop.permute.xlu0 %79
    %vm81 = vcmask 261312
    %82 = vst.msk [vmem:[#allocation0] sm:$0x1] %vm81, %v80
    %s83 = scalar_lea.vmem %s0, 2
    %v84 = vld [vmem:[%s83] sm:$0x1]
    %85 = vrot.lane.b32.xlu0 %v84, 16
    %v86 = vpop.permute.xlu0 %85
    %vm87 = vcmask 195712
    %88 = vst.msk [vmem:[#allocation0] sm:$0x1] %vm87, %v86
    %s89 = scalar_lea.vmem %s0, 1
    %v90 = vld [vmem:[%s89] sm:$0x1]
    %91 = vrot.lane.b32.xlu0 %v90, 8
    %v92 = vpop.permute.xlu0 %91
    %vm93 = vcmask 130112
    %94 = vst.msk [vmem:[#allocation0] sm:$0x1] %vm93, %v92
    %s96 = ssub.s32 2, 1
    %v97 = vld [vmem:[#allocation0] sm:%s96]
    %s99 = ssub.s32 2, 1
    %100 = vst [vmem:[%s1] sm:%s99] %v97

// kernel: basic_block_forward.1
$region0: #{basic_block_forward.1}
  #allocation0 [shape = 'u32[]', space=smem, size = 0x4, offset = 0x4, fixed_abs, tag = 'smem constant byte address 0x4 - core index']
  #allocation1 [shape = 'u32[72,128]{1,0:T(1,128)}', space=vmem, size = 0x9000, scoped, tag = 'internal scratch']
  %s0 = inlined_call_operand.vmem [shape: f32[2,16,64], index: 0, kind: input, shape index: {}]
  %s1 = inlined_call_operand.vmem [shape: bf16[3,16,16], index: 1, kind: input, shape index: {}]
  %s2 = inlined_call_operand.vmem [shape: bf16[3,64,128], index: 2, kind: input, shape index: {}]
  %s3 = inlined_call_operand.vmem [shape: f32[1,128], index: 3, kind: input, shape index: {}]
  %s4 = inlined_call_operand.vmem [shape: bf16[3,8,16], index: 4, kind: input, shape index: {}]
  %s5 = inlined_call_operand.vmem [shape: bf16[3,128,64], index: 5, kind: input, shape index: {}]
  %s6 = inlined_call_operand.vmem [shape: f32[1,64], index: 6, kind: input, shape index: {}]
  %s7 = inlined_call_operand.vmem [shape: bf16[1,8,16], index: 7, kind: input, shape index: {}]
  %s8 = inlined_call_operand.vmem [shape: bf16[1,64,64], index: 8, kind: input, shape index: {}]
  %s9 = inlined_call_operand.vmem [shape: f32[2,8,64], index: 9, kind: output, shape index: {}]
  %s10 = sld [smem:[#allocation0]]
  $region69: #{basic_block_forward.1} parent=0
    _
  %s12 = ssub.s32 1, %s10
  %s13 = scalar_select 0, %s12, %s10
  loop: start=0, step=1, limit=4
  $region2: #{basic_block_forward.1} parent=0 // loop_pre_header
    _
  $region3: #{basic_block_forward.1} parent=0 // loop_header
    %s15 = sphi 0, %s19
    %p16 = scmp.ge.s32.totalorder %s15, 4
    %s25 = sphi 0, %s27
    %s28 = sphi 0, %s25
    %s29 = sphi 0, %s28
    %s45 = sphi 0, %s29
    %s49 = sphi 0, %s49
    %s51 = sphi 0, %s49
    %s52 = sphi 0, %s51
    %s66 = sphi 0, %s52
    %s70 = sphi 0, %s70
    %s72 = sphi 0, %s70
    %s73 = sphi 0, %s72
    %s87 = sphi 0, %s73
    %s91 = sphi 0, %s91
    %s93 = sphi 0, %s91
    %s94 = sphi 0, %s93
    %s108 = sphi 0, %s94
    %s112 = sphi 0, %s112
    %s114 = sphi 0, %s112
    %s115 = sphi 0, %s114
    %s129 = sphi 0, %s115
    %s133 = sphi 0, %s133
    %s135 = sphi 0, %s133
    %s136 = sphi 0, %s135
    %s150 = sphi 0, %s136
    %s154 = sphi 0, %s154
    %s156 = sphi 0, %s154
    %s157 = sphi 0, %s156
    %s171 = sphi 0, %s157
    %s175 = sphi 0, %s175
    %s177 = sphi 0, %s175
    %s178 = sphi 0, %s177
    %s192 = sphi 0, %s178
    %s196 = sphi 0, %s196
    %s198 = sphi 0, %s196
    %s199 = sphi 0, %s198
    %s213 = sphi 0, %s199
    %s219 = sphi 0, %s221
    %s222 = sphi 0, %s219
    %s223 = sphi 0, %s222
    %s239 = sphi 0, %s223
  $region4: #{basic_block_forward.1} parent=0 // loop_header_branch
    %18 = sbr.rel (%p16) target = $region8
  $region5: #{basic_block_forward.1} parent=0 // loop_body
    %s20 = ssub.s32 %s15, 1
    %s21 = ssub.s32 %s15, 2
    %s22 = sadd.s32 %s15, 1
    %s23 = ssub.s32 %s15, %s22
    %p24 = scmp.eq.s32.totalorder %s23, 0
    %s26 = sadd.s32 %s25, 1
    %s27 = scalar_select %p24, %s25, %s26
    %p30 = pneg %p24
    %p31 = scmp.eq.s32.totalorder %s15, 1
    %p32 = por %p30, %p31
    %p33 = scmp.ne.s32.totalorder %s25, %s28
    %p34 = scmp.eq.s32.totalorder %s15, 0
    %p35 = por %p33, %p34
    %p36 = scmp.ne.s32.totalorder %s25, %s28
    %p37 = scmp.eq.s32.totalorder %s20, 1
    %p38 = por %p36, %p37
    %p39 = scmp.ne.s32.totalorder %s28, %s29
    %p40 = scmp.eq.s32.totalorder %s20, 0
    %p41 = por %p39, %p40
    %p42 = scmp.ne.s32.totalorder %s28, %s29
    %p43 = scmp.eq.s32.totalorder %s21, 1
    %p44 = por %p42, %p43
    %p46 = scmp.ne.s32.totalorder %s29, %s45
    %p47 = scmp.eq.s32.totalorder %s21, 0
    %p48 = por %p46, %p47
    %s50 = sadd.s32 %s49, 1
    %p53 = scmp.eq.s32.totalorder %s15, 1
    %p54 = scmp.ne.s32.totalorder %s49, %s51
    %p55 = scmp.eq.s32.totalorder %s15, 0
    %p56 = por %p54, %p55
    %p57 = scmp.ne.s32.totalorder %s49, %s51
    %p58 = scmp.eq.s32.totalorder %s20, 1
    %p59 = por %p57, %p58
    %p60 = scmp.ne.s32.totalorder %s51, %s52
    %p61 = scmp.eq.s32.totalorder %s20, 0
    %p62 = por %p60, %p61
    %p63 = scmp.ne.s32.totalorder %s51, %s52
    %p64 = scmp.eq.s32.totalorder %s21, 1
    %p65 = por %p63, %p64
    %p67 = scmp.ne.s32.totalorder %s52, %s66
    %p68 = scmp.eq.s32.totalorder %s21, 0
    %p69 = por %p67, %p68
    %s71 = sadd.s32 %s70, 1
    %p74 = scmp.eq.s32.totalorder %s15, 1
    %p75 = scmp.ne.s32.totalorder %s70, %s72
    %p76 = scmp.eq.s32.totalorder %s15, 0
    %p77 = por %p75, %p76
    %p78 = scmp.ne.s32.totalorder %s70, %s72
    %p79 = scmp.eq.s32.totalorder %s20, 1
    %p80 = por %p78, %p79
    %p81 = scmp.ne.s32.totalorder %s72, %s73
    %p82 = scmp.eq.s32.totalorder %s20, 0
    %p83 = por %p81, %p82
    %p84 = scmp.ne.s32.totalorder %s72, %s73
    %p85 = scmp.eq.s32.totalorder %s21, 1
    %p86 = por %p84, %p85
    %p88 = scmp.ne.s32.totalorder %s73, %s87
    %p89 = scmp.eq.s32.totalorder %s21, 0
    %p90 = por %p88, %p89
    %s92 = sadd.s32 %s91, 1
    %p95 = scmp.eq.s32.totalorder %s15, 1
    %p96 = scmp.ne.s32.totalorder %s91, %s93
    %p97 = scmp.eq.s32.totalorder %s15, 0
    %p98 = por %p96, %p97
    %p99 = scmp.ne.s32.totalorder %s91, %s93
    %p100 = scmp.eq.s32.totalorder %s20, 1
    %p101 = por %p99, %p100
    %p102 = scmp.ne.s32.totalorder %s93, %s94
    %p103 = scmp.eq.s32.totalorder %s20, 0
    %p104 = por %p102, %p103
    %p105 = scmp.ne.s32.totalorder %s93, %s94
    %p106 = scmp.eq.s32.totalorder %s21, 1
    %p107 = por %p105, %p106
    %p109 = scmp.ne.s32.totalorder %s94, %s108
    %p110 = scmp.eq.s32.totalorder %s21, 0
    %p111 = por %p109, %p110
    %s113 = sadd.s32 %s112, 1
    %p116 = scmp.eq.s32.totalorder %s15, 1
    %p117 = scmp.ne.s32.totalorder %s112, %s114
    %p118 = scmp.eq.s32.totalorder %s15, 0
    %p119 = por %p117, %p118
    %p120 = scmp.ne.s32.totalorder %s112, %s114
    %p121 = scmp.eq.s32.totalorder %s20, 1
    %p122 = por %p120, %p121
    %p123 = scmp.ne.s32.totalorder %s114, %s115
    %p124 = scmp.eq.s32.totalorder %s20, 0
    %p125 = por %p123, %p124
    %p126 = scmp.ne.s32.totalorder %s114, %s115
    %p127 = scmp.eq.s32.totalorder %s21, 1
    %p128 = por %p126, %p127
    %p130 = scmp.ne.s32.totalorder %s115, %s129
    %p131 = scmp.eq.s32.totalorder %s21, 0
    %p132 = por %p130, %p131
    %s134 = sadd.s32 %s133, 1
    %p137 = scmp.eq.s32.totalorder %s15, 1
    %p138 = scmp.ne.s32.totalorder %s133, %s135
    %p139 = scmp.eq.s32.totalorder %s15, 0
    %p140 = por %p138, %p139
    %p141 = scmp.ne.s32.totalorder %s133, %s135
    %p142 = scmp.eq.s32.totalorder %s20, 1
    %p143 = por %p141, %p142
    %p144 = scmp.ne.s32.totalorder %s135, %s136
    %p145 = scmp.eq.s32.totalorder %s20, 0
    %p146 = por %p144, %p145
    %p147 = scmp.ne.s32.totalorder %s135, %s136
    %p148 = scmp.eq.s32.totalorder %s21, 1
    %p149 = por %p147, %p148
    %p151 = scmp.ne.s32.totalorder %s136, %s150
    %p152 = scmp.eq.s32.totalorder %s21, 0
    %p153 = por %p151, %p152
    %s155 = sadd.s32 %s154, 1
    %p158 = scmp.eq.s32.totalorder %s15, 1
    %p159 = scmp.ne.s32.totalorder %s154, %s156
    %p160 = scmp.eq.s32.totalorder %s15, 0
    %p161 = por %p159, %p160
    %p162 = scmp.ne.s32.totalorder %s154, %s156
    %p163 = scmp.eq.s32.totalorder %s20, 1
    %p164 = por %p162, %p163
    %p165 = scmp.ne.s32.totalorder %s156, %s157
    %p166 = scmp.eq.s32.totalorder %s20, 0
    %p167 = por %p165, %p166
    %p168 = scmp.ne.s32.totalorder %s156, %s157
    %p169 = scmp.eq.s32.totalorder %s21, 1
    %p170 = por %p168, %p169
    %p172 = scmp.ne.s32.totalorder %s157, %s171
    %p173 = scmp.eq.s32.totalorder %s21, 0
    %p174 = por %p172, %p173
    %s176 = sadd.s32 %s175, 1
    %p179 = scmp.eq.s32.totalorder %s15, 1
    %p180 = scmp.ne.s32.totalorder %s175, %s177
    %p181 = scmp.eq.s32.totalorder %s15, 0
    %p182 = por %p180, %p181
    %p183 = scmp.ne.s32.totalorder %s175, %s177
    %p184 = scmp.eq.s32.totalorder %s20, 1
    %p185 = por %p183, %p184
    %p186 = scmp.ne.s32.totalorder %s177, %s178
    %p187 = scmp.eq.s32.totalorder %s20, 0
    %p188 = por %p186, %p187
    %p189 = scmp.ne.s32.totalorder %s177, %s178
    %p190 = scmp.eq.s32.totalorder %s21, 1
    %p191 = por %p189, %p190
    %p193 = scmp.ne.s32.totalorder %s178, %s192
    %p194 = scmp.eq.s32.totalorder %s21, 0
    %p195 = por %p193, %p194
    %s197 = sadd.s32 %s196, 1
    %p200 = scmp.eq.s32.totalorder %s15, 1
    %p201 = scmp.ne.s32.totalorder %s196, %s198
    %p202 = scmp.eq.s32.totalorder %s15, 0
    %p203 = por %p201, %p202
    %p204 = scmp.ne.s32.totalorder %s196, %s198
    %p205 = scmp.eq.s32.totalorder %s20, 1
    %p206 = por %p204, %p205
    %p207 = scmp.ne.s32.totalorder %s198, %s199
    %p208 = scmp.eq.s32.totalorder %s20, 0
    %p209 = por %p207, %p208
    %p210 = scmp.ne.s32.totalorder %s198, %s199
    %p211 = scmp.eq.s32.totalorder %s21, 1
    %p212 = por %p210, %p211
    %p214 = scmp.ne.s32.totalorder %s199, %s213
    %p215 = scmp.eq.s32.totalorder %s21, 0
    %p216 = por %p214, %p215
    %s217 = ssub.s32 %s15, %s22
    %p218 = scmp.eq.s32.totalorder %s217, 0
    %s220 = sadd.s32 %s219, 1
    %s221 = scalar_select %p218, %s219, %s220
    %p224 = pneg %p218
    %p225 = scmp.eq.s32.totalorder %s15, 1
    %p226 = por %p224, %p225
    %p227 = scmp.ne.s32.totalorder %s219, %s222
    %p228 = scmp.eq.s32.totalorder %s15, 0
    %p229 = por %p227, %p228
    %p230 = scmp.ne.s32.totalorder %s219, %s222
    %p231 = scmp.eq.s32.totalorder %s20, 1
    %p232 = por %p230, %p231
    %p233 = scmp.ne.s32.totalorder %s222, %s223
    %p234 = scmp.eq.s32.totalorder %s20, 0
    %p235 = por %p233, %p234
    %p236 = scmp.ne.s32.totalorder %s222, %s223
    %p237 = scmp.eq.s32.totalorder %s21, 1
    %p238 = por %p236, %p237
    %p240 = scmp.ne.s32.totalorder %s223, %s239
    %p241 = scmp.eq.s32.totalorder %s21, 0
    %p242 = por %p240, %p241
    %p243 = scmp.le.s32.totalorder 1, %s15
    %p244 = scmp.lt.s32.totalorder %s15, 3
    %p245 = pnand %p243, %p244
    %p246 = pneg %p245
    // Predicated region
    $region9: #{basic_block_forward.1} parent=5 // pred_check
      _
    $region10: #{basic_block_forward.1} parent=5 // pred_check_branch
      %248 = sbr.rel (%p245) target = $region12
    $region11: #{basic_block_forward.1} parent=5 // pred_region
      %s249 = ssub.s32 %s15, 1
      // Predicated region
      $region13: #{basic_block_forward.1} parent=11 // pred_check
        %p250 = pneg %p62
      $region14: #{basic_block_forward.1} parent=11 // pred_check_branch
        %252 = sbr.rel (%p250) target = $region16
      $region15: #{basic_block_forward.1} parent=11 // pred_region
        _
      $region16: #{basic_block_forward.1} parent=11 // pred_fallthru
        _
      // Predicated region
      $region17: #{basic_block_forward.1} parent=11 // pred_check
        %p253 = pneg %p83
      $region18: #{basic_block_forward.1} parent=11 // pred_check_branch
        %255 = sbr.rel (%p253) target = $region20
      $region19: #{basic_block_forward.1} parent=11 // pred_region
        _
      $region20: #{basic_block_forward.1} parent=11 // pred_fallthru
        _
      // Predicated region
      $region21: #{basic_block_forward.1} parent=11 // pred_check
        %p256 = pneg %p104
      $region22: #{basic_block_forward.1} parent=11 // pred_check_branch
        %258 = sbr.rel (%p256) target = $region24
      $region23: #{basic_block_forward.1} parent=11 // pred_region
        _
      $region24: #{basic_block_forward.1} parent=11 // pred_fallthru
        _
      // Predicated region
      $region25: #{basic_block_forward.1} parent=11 // pred_check
        %p259 = pneg %p125
      $region26: #{basic_block_forward.1} parent=11 // pred_check_branch
        %261 = sbr.rel (%p259) target = $region28
      $region27: #{basic_block_forward.1} parent=11 // pred_region
        _
      $region28: #{basic_block_forward.1} parent=11 // pred_fallthru
        _
      // Predicated region
      $region29: #{basic_block_forward.1} parent=11 // pred_check
        %p262 = pneg %p146
      $region30: #{basic_block_forward.1} parent=11 // pred_check_branch
        %264 = sbr.rel (%p262) target = $region32
      $region31: #{basic_block_forward.1} parent=11 // pred_region
        _
      $region32: #{basic_block_forward.1} parent=11 // pred_fallthru
        _
      // Predicated region
      $region33: #{basic_block_forward.1} parent=11 // pred_check
        %p265 = pneg %p167
      $region34: #{basic_block_forward.1} parent=11 // pred_check_branch
        %267 = sbr.rel (%p265) target = $region36
      $region35: #{basic_block_forward.1} parent=11 // pred_region
        _
      $region36: #{basic_block_forward.1} parent=11 // pred_fallthru
        _
      // Predicated region
      $region37: #{basic_block_forward.1} parent=11 // pred_check
        %p268 = pneg %p188
      $region38: #{basic_block_forward.1} parent=11 // pred_check_branch
        %270 = sbr.rel (%p268) target = $region40
      $region39: #{basic_block_forward.1} parent=11 // pred_region
        _
      $region40: #{basic_block_forward.1} parent=11 // pred_fallthru
        _
      // Predicated region
      $region41: #{basic_block_forward.1} parent=11 // pred_check
        %p271 = pneg %p209
      $region42: #{basic_block_forward.1} parent=11 // pred_check_branch
        %273 = sbr.rel (%p271) target = $region44
      $region43: #{basic_block_forward.1} parent=11 // pred_region
        _
      $region44: #{basic_block_forward.1} parent=11 // pred_fallthru
        _
    $region12: #{basic_block_forward.1} parent=5 // pred_fallthru
      _
    %p274 = scmp.lt.s32.totalorder %s15, 2
    // Predicated region
    $region45: #{basic_block_forward.1} parent=5 // pred_check
      %p275 = pneg %p274
    $region46: #{basic_block_forward.1} parent=5 // pred_check_branch
      %277 = sbr.rel (%p275) target = $region48
    $region47: #{basic_block_forward.1} parent=5 // pred_region
      // Predicated region
      $region49: #{basic_block_forward.1} parent=47 // pred_check
        %p278 = pneg %p35
      $region50: #{basic_block_forward.1} parent=47 // pred_check_branch
        %280 = sbr.rel (%p278) target = $region52
      $region51: #{basic_block_forward.1} parent=47 // pred_region
        %p281 = scmp.lt.s32.totalorder %s15, 1
        %s282 = scalar_select %p281, %s15, 1
        %s283 = smul.addr %s282, 2
        %s284 = smul.addr %s283, 8
        %s285 = scalar_lea.vmem %s0, %s284
      $region52: #{basic_block_forward.1} parent=47 // pred_fallthru
        _
    $region48: #{basic_block_forward.1} parent=5 // pred_fallthru
      _
    %p286 = scmp.le.s32.totalorder 1, %s15
    %p287 = scmp.lt.s32.totalorder %s15, 3
    %p288 = pnand %p286, %p287
    %p289 = pneg %p288
    // Predicated region
    $region53: #{basic_block_forward.1} parent=5 // pred_check
      _
    $region54: #{basic_block_forward.1} parent=5 // pred_check_branch
      %291 = sbr.rel (%p288) target = $region56
    $region55: #{basic_block_forward.1} parent=5 // pred_region
      %s292 = ssub.s32 %s15, 1
      %p293 = scmp.lt.s32.totalorder %s20, 1
      %s294 = scalar_select %p293, %s20, 1
      %s295 = smul.addr %s294, 2
      %s296 = smul.addr %s295, 8
      %s297 = scalar_lea.vmem %s0, %s296
      %p298 = pneg %p41
      %p299 = pneg %p38
      %p300 = pneg %p62
      %p301 = pneg %p59
      %p302 = pneg %p83
      %p303 = pneg %p80
      %p304 = pneg %p104
      %p305 = pneg %p101
      %p306 = pneg %p125
      %p307 = pneg %p122
      %p308 = pneg %p146
      %p309 = pneg %p143
      %p310 = pneg %p167
      %p311 = pneg %p164
      %p312 = pneg %p188
      %p313 = pneg %p185
      %p314 = pneg %p209
      %p315 = pneg %p206
      %p316 = pneg %p235
      %p317 = pneg %p232
      %p318 = scmp.lt.s32.totalorder %s20, 1
      %s319 = scalar_select %p318, %s20, 1
      %s320 = smul.addr %s319, 8
      %s321 = scalar_lea.vmem %s9, %s320
      %p322 = scmp.lt.s32.totalorder %s20, 1
      %s323 = scalar_select %p322, %s20, 1
      %s324 = smul.addr %s323, 2
      %s325 = smul.addr %s324, 8
      %s326 = scalar_lea.vmem %s0, %s325
      %p327 = scmp.lt.s32.totalorder %s20, 1
      %s328 = scalar_select %p327, %s20, 1
      %s329 = smul.addr %s328, 8
      %s330 = scalar_lea.vmem %s9, %s329
      %v332 = vld [vmem:[%s326] sm:$0xff]
      %v333 = vld [vmem:[%s326 + $0x8] sm:$0xff]
      %v334 = vpack.c.bf16 %v333, %v332
      %v335 = vld [vmem:[%s1] sm:$0xf]
      %v336 = vld [vmem:[%s1 + $0x4] sm:$0xf]
      %v339 = vunpack.c.l.b16 %v335
      %v340 = vunpack.c.l.b16 %v336
      %v341 = vpack.c.b16 %v340, %v339
      %vm342 = vcmask 130048
      %v344 = vsel %vm342, %v341, 0
      %346 = vmatpush.bf16.msra.mxu0 0
      %347 = vmatpush.bf16.msra.mxu0 0
      %348 = vmatpush.bf16.msra.mxu0 0
      %349 = vmatpush.bf16.msra.mxu0 0
      %350 = vmatpush.bf16.msra.mxu0 0
      %351 = vmatpush.bf16.msra.mxu0 0
      %352 = vmatpush.bf16.msra.mxu0 0
      %353 = vmatpush.bf16.msra.mxu0 %v334
      %354 = vmatmul.bf16.gmra.mxu0 %v344
      %v355 = vpop.f32.mrf.mxu0
      %v356 = vadd.f32 0.0, %v355
      %v357 = vpop.f32.mrf.mxu0
      %v358 = vadd.f32 0.0, %v357
      %359 = vdwg.mxu0
      %v360 = vpack.c.bf16 %v358, %v356
      %v361 = vld [vmem:[%s2] sm:$0xf]
      %v362 = vld [vmem:[%s2 + $0x4] sm:$0xf]
      %v363 = vld [vmem:[%s2 + $0x8] sm:$0xf]
      %v364 = vld [vmem:[%s2 + $0xc] sm:$0xf]
      %v365 = vld [vmem:[%s2 + $0x10] sm:$0xf]
      %v366 = vld [vmem:[%s2 + $0x14] sm:$0xf]
      %v367 = vld [vmem:[%s2 + $0x18] sm:$0xf]
      %v368 = vld [vmem:[%s2 + $0x1c] sm:$0xf]
      %s369 = scalar_lea.vmem %s1, 8
      %v370 = vld [vmem:[%s369] sm:$0xf]
      %v371 = vld [vmem:[%s369 + $0x4] sm:$0xf]
      %v374 = vunpack.c.l.b16 %v370
      %v375 = vunpack.c.l.b16 %v371
      %v376 = vpack.c.b16 %v375, %v374
      %v378 = vsel %vm342, %v376, 0
      %380 = vmatpush.bf16.msra.mxu0 0
      %381 = vmatpush.bf16.msra.mxu0 0
      %382 = vmatpush.bf16.msra.mxu0 0
      %383 = vmatpush.bf16.msra.mxu0 0
      %384 = vmatpush.bf16.msra.mxu0 0
      %385 = vmatpush.bf16.msra.mxu0 0
      %386 = vmatpush.bf16.msra.mxu0 0
      %387 = vmatpush.bf16.msra.mxu0 %v334
      %388 = vmatmul.bf16.gmra.mxu0 %v378
      %v389 = vpop.f32.mrf.mxu0
      %v390 = vadd.f32 0.0, %v389
      %v391 = vpop.f32.mrf.mxu0
      %v392 = vadd.f32 0.0, %v391
      %393 = vdwg.mxu0
      %v394 = vpack.c.bf16 %v392, %v390
      %s395 = scalar_lea.vmem %s2, 32
      %v396 = vld [vmem:[%s395] sm:$0xf]
      %v397 = vld [vmem:[%s395 + $0x4] sm:$0xf]
      %v398 = vld [vmem:[%s395 + $0x8] sm:$0xf]
      %v399 = vld [vmem:[%s395 + $0xc] sm:$0xf]
      %v400 = vld [vmem:[%s395 + $0x10] sm:$0xf]
      %v401 = vld [vmem:[%s395 + $0x14] sm:$0xf]
      %v402 = vld [vmem:[%s395 + $0x18] sm:$0xf]
      %v403 = vld [vmem:[%s395 + $0x1c] sm:$0xf]
      %v412 = vunpack.c.l.b16 %v396
      %v413 = vunpack.c.l.b16 %v397
      %v414 = vunpack.c.l.b16 %v398
      %v415 = vunpack.c.l.b16 %v399
      %v416 = vunpack.c.l.b16 %v400
      %v417 = vunpack.c.l.b16 %v401
      %v418 = vunpack.c.l.b16 %v402
      %v419 = vunpack.c.l.b16 %v403
      %v420 = vpack.c.b16 %v413, %v412
      %v421 = vpack.c.b16 %v415, %v414
      %v422 = vpack.c.b16 %v417, %v416
      %v423 = vpack.c.b16 %v419, %v418
      %vm428 = vcmask 523264
      %v430 = vsel %vm428, %v394, 0
      %432 = vmatpush.bf16.msra.mxu0 0
      %433 = vmatpush.bf16.msra.mxu0 0
      %434 = vmatpush.bf16.msra.mxu0 0
      %435 = vmatpush.bf16.msra.mxu0 0
      %436 = vmatpush.bf16.msra.mxu0 %v423
      %437 = vmatpush.bf16.msra.mxu0 %v422
      %438 = vmatpush.bf16.msra.mxu0 %v421
      %439 = vmatpush.bf16.msra.mxu0 %v420
      %440 = vmatmul.bf16.gmra.mxu0 %v430
      %v441 = vpop.f32.mrf.mxu0
      %v442 = vadd.f32 0.0, %v441
      %v443 = vpop.f32.mrf.mxu0
      %v444 = vadd.f32 0.0, %v443
      %445 = vdwg.mxu0
      %v454 = vunpack.c.l.b16 %v361
      %v455 = vunpack.c.l.b16 %v362
      %v456 = vunpack.c.l.b16 %v363
      %v457 = vunpack.c.l.b16 %v364
      %v458 = vunpack.c.l.b16 %v365
      %v459 = vunpack.c.l.b16 %v366
      %v460 = vunpack.c.l.b16 %v367
      %v461 = vunpack.c.l.b16 %v368
      %v462 = vpack.c.b16 %v455, %v454
      %v463 = vpack.c.b16 %v457, %v456
      %v464 = vpack.c.b16 %v459, %v458
      %v465 = vpack.c.b16 %v461, %v460
      %v471 = vsel %vm428, %v360, 0
      %473 = vmatpush.bf16.msra.mxu0 0
      %474 = vmatpush.bf16.msra.mxu0 0
      %475 = vmatpush.bf16.msra.mxu0 0
      %476 = vmatpush.bf16.msra.mxu0 0
      %477 = vmatpush.bf16.msra.mxu0 %v465
      %478 = vmatpush.bf16.msra.mxu0 %v464
      %479 = vmatpush.bf16.msra.mxu0 %v463
      %480 = vmatpush.bf16.msra.mxu0 %v462
      %481 = vmatmul.bf16.gmra.mxu0 %v471
      %v482 = vpop.f32.mrf.mxu0
      %v483 = vadd.f32 %v442, %v482
      %v484 = vpop.f32.mrf.mxu0
      %v485 = vadd.f32 %v444, %v484
      %486 = vdwg.mxu0
      %s487 = scalar_lea.vmem %s1, 16
      %v488 = vld [vmem:[%s487] sm:$0xf]
      %v489 = vld [vmem:[%s487 + $0x4] sm:$0xf]
      %v492 = vunpack.c.l.b16 %v488
      %v493 = vunpack.c.l.b16 %v489
      %v494 = vpack.c.b16 %v493, %v492
      %v496 = vsel %vm342, %v494, 0
      %498 = vmatpush.bf16.msra.mxu0 0
      %499 = vmatpush.bf16.msra.mxu0 0
      %500 = vmatpush.bf16.msra.mxu0 0
      %501 = vmatpush.bf16.msra.mxu0 0
      %502 = vmatpush.bf16.msra.mxu0 0
      %503 = vmatpush.bf16.msra.mxu0 0
      %504 = vmatpush.bf16.msra.mxu0 0
      %505 = vmatpush.bf16.msra.mxu0 %v334
      %506 = vmatmul.bf16.gmra.mxu0 %v496
      %v507 = vpop.f32.mrf.mxu0
      %v508 = vadd.f32 0.0, %v507
      %v509 = vpop.f32.mrf.mxu0
      %v510 = vadd.f32 0.0, %v509
      %511 = vdwg.mxu0
      %v512 = vpack.c.bf16 %v510, %v508
      %s513 = scalar_lea.vmem %s2, 64
      %v514 = vld [vmem:[%s513] sm:$0xf]
      %v515 = vld [vmem:[%s513 + $0x4] sm:$0xf]
      %v516 = vld [vmem:[%s513 + $0x8] sm:$0xf]
      %v517 = vld [vmem:[%s513 + $0xc] sm:$0xf]
      %v518 = vld [vmem:[%s513 + $0x10] sm:$0xf]
      %v519 = vld [vmem:[%s513 + $0x14] sm:$0xf]
      %v520 = vld [vmem:[%s513 + $0x18] sm:$0xf]
      %v521 = vld [vmem:[%s513 + $0x1c] sm:$0xf]
      %v530 = vunpack.c.l.b16 %v514
      %v531 = vunpack.c.l.b16 %v515
      %v532 = vunpack.c.l.b16 %v516
      %v533 = vunpack.c.l.b16 %v517
      %v534 = vunpack.c.l.b16 %v518
      %v535 = vunpack.c.l.b16 %v519
      %v536 = vunpack.c.l.b16 %v520
      %v537 = vunpack.c.l.b16 %v521
      %v538 = vpack.c.b16 %v531, %v530
      %v539 = vpack.c.b16 %v533, %v532
      %v540 = vpack.c.b16 %v535, %v534
      %v541 = vpack.c.b16 %v537, %v536
      %v547 = vsel %vm428, %v512, 0
      %549 = vmatpush.bf16.msra.mxu0 0
      %550 = vmatpush.bf16.msra.mxu0 0
      %551 = vmatpush.bf16.msra.mxu0 0
      %552 = vmatpush.bf16.msra.mxu0 0
      %553 = vmatpush.bf16.msra.mxu0 %v541
      %554 = vmatpush.bf16.msra.mxu0 %v540
      %555 = vmatpush.bf16.msra.mxu0 %v539
      %556 = vmatpush.bf16.msra.mxu0 %v538
      %557 = vmatmul.bf16.gmra.mxu0 %v547
      %v558 = vpop.f32.mrf.mxu0
      %v559 = vadd.f32 0.0, %v558
      %v560 = vpop.f32.mrf.mxu0
      %v561 = vadd.f32 0.0, %v560
      %562 = vdwg.mxu0
      %v563 = vadd.f32 %v483, %v559
      %v564 = vadd.f32 %v485, %v561
      %v565 = vld [vmem:[%s3] sm:$0x1]
      %v567 = vperm.slane %v565, 0
      %v569 = vadd.f32 %v563, %v567
      %v570 = vadd.f32 %v564, %v567
      %v571 = vmax.f32 %v569, 0.0
      %v572 = vmax.f32 %v570, 0.0
      %v573 = vpack.c.bf16 %v572, %v571
      %v574 = vld [vmem:[%s4] sm:$0xf]
      %v576 = vsel %vm342, %v574, 0
      %578 = vmatpush.bf16.msra.mxu0 0
      %579 = vmatpush.bf16.msra.mxu0 0
      %580 = vmatpush.bf16.msra.mxu0 0
      %581 = vmatpush.bf16.msra.mxu0 0
      %582 = vmatpush.bf16.msra.mxu0 0
      %583 = vmatpush.bf16.msra.mxu0 0
      %584 = vmatpush.bf16.msra.mxu0 0
      %585 = vmatpush.bf16.msra.mxu0 %v573
      %586 = vmatmul.bf16.gmra.mxu0 %v576
      %v587 = vpop.f32.mrf.mxu0
      %v588 = vadd.f32 0.0, %v587
      %v589 = vpop.f32.mrf.mxu0
      %590 = vdwg.mxu0
      %v591 = vpack.c.bf16 %v588, %v588
      %v592 = vld [vmem:[%s5] sm:$0xf]
      %v593 = vld [vmem:[%s5 + $0x4] sm:$0xf]
      %v594 = vld [vmem:[%s5 + $0x8] sm:$0xf]
      %v595 = vld [vmem:[%s5 + $0xc] sm:$0xf]
      %v596 = vld [vmem:[%s5 + $0x10] sm:$0xf]
      %v597 = vld [vmem:[%s5 + $0x14] sm:$0xf]
      %v598 = vld [vmem:[%s5 + $0x18] sm:$0xf]
      %v599 = vld [vmem:[%s5 + $0x1c] sm:$0xf]
      %v600 = vld [vmem:[%s5 + $0x20] sm:$0xf]
      %v601 = vld [vmem:[%s5 + $0x24] sm:$0xf]
      %v602 = vld [vmem:[%s5 + $0x28] sm:$0xf]
      %v603 = vld [vmem:[%s5 + $0x2c] sm:$0xf]
      %v604 = vld [vmem:[%s5 + $0x30] sm:$0xf]
      %v605 = vld [vmem:[%s5 + $0x34] sm:$0xf]
      %v606 = vld [vmem:[%s5 + $0x38] sm:$0xf]
      %v607 = vld [vmem:[%s5 + $0x3c] sm:$0xf]
      %s608 = scalar_lea.vmem %s4, 4
      %v609 = vld [vmem:[%s608] sm:$0xf]
      %v611 = vsel %vm342, %v609, 0
      %613 = vmatpush.bf16.msra.mxu0 0
      %614 = vmatpush.bf16.msra.mxu0 0
      %615 = vmatpush.bf16.msra.mxu0 0
      %616 = vmatpush.bf16.msra.mxu0 0
      %617 = vmatpush.bf16.msra.mxu0 0
      %618 = vmatpush.bf16.msra.mxu0 0
      %619 = vmatpush.bf16.msra.mxu0 0
      %620 = vmatpush.bf16.msra.mxu0 %v573
      %621 = vmatmul.bf16.gmra.mxu0 %v611
      %v622 = vpop.f32.mrf.mxu0
      %v623 = vadd.f32 0.0, %v622
      %v624 = vpop.f32.mrf.mxu0
      %625 = vdwg.mxu0
      %v626 = vpack.c.bf16 %v623, %v623
      %s627 = scalar_lea.vmem %s5, 64
      %v628 = vld [vmem:[%s627] sm:$0xf]
      %v629 = vld [vmem:[%s627 + $0x4] sm:$0xf]
      %v630 = vld [vmem:[%s627 + $0x8] sm:$0xf]
      %v631 = vld [vmem:[%s627 + $0xc] sm:$0xf]
      %v632 = vld [vmem:[%s627 + $0x10] sm:$0xf]
      %v633 = vld [vmem:[%s627 + $0x14] sm:$0xf]
      %v634 = vld [vmem:[%s627 + $0x18] sm:$0xf]
      %v635 = vld [vmem:[%s627 + $0x1c] sm:$0xf]
      %v636 = vld [vmem:[%s627 + $0x20] sm:$0xf]
      %v637 = vld [vmem:[%s627 + $0x24] sm:$0xf]
      %v638 = vld [vmem:[%s627 + $0x28] sm:$0xf]
      %v639 = vld [vmem:[%s627 + $0x2c] sm:$0xf]
      %v640 = vld [vmem:[%s627 + $0x30] sm:$0xf]
      %v641 = vld [vmem:[%s627 + $0x34] sm:$0xf]
      %v642 = vld [vmem:[%s627 + $0x38] sm:$0xf]
      %v643 = vld [vmem:[%s627 + $0x3c] sm:$0xf]
      %v660 = vunpack.c.l.b16 %v628
      %v661 = vunpack.c.l.b16 %v629
      %v662 = vunpack.c.l.b16 %v630
      %v663 = vunpack.c.l.b16 %v631
      %v664 = vunpack.c.l.b16 %v632
      %v665 = vunpack.c.l.b16 %v633
      %v666 = vunpack.c.l.b16 %v634
      %v667 = vunpack.c.l.b16 %v635
      %v668 = vunpack.c.l.b16 %v636
      %v669 = vunpack.c.l.b16 %v637
      %v670 = vunpack.c.l.b16 %v638
      %v671 = vunpack.c.l.b16 %v639
      %v672 = vunpack.c.l.b16 %v640
      %v673 = vunpack.c.l.b16 %v641
      %v674 = vunpack.c.l.b16 %v642
      %v675 = vunpack.c.l.b16 %v643
      %v676 = vpack.c.b16 %v661, %v660
      %v677 = vpack.c.b16 %v663, %v662
      %v678 = vpack.c.b16 %v665, %v664
      %v679 = vpack.c.b16 %v667, %v666
      %v680 = vpack.c.b16 %v669, %v668
      %v681 = vpack.c.b16 %v671, %v670
      %v682 = vpack.c.b16 %v673, %v672
      %v683 = vpack.c.b16 %v675, %v674
      %692 = vmatpush.bf16.msra.mxu0 %v683
      %693 = vmatpush.bf16.msra.mxu0 %v682
      %694 = vmatpush.bf16.msra.mxu0 %v681
      %695 = vmatpush.bf16.msra.mxu0 %v680
      %696 = vmatpush.bf16.msra.mxu0 %v679
      %697 = vmatpush.bf16.msra.mxu0 %v678
      %698 = vmatpush.bf16.msra.mxu0 %v677
      %699 = vmatpush.bf16.msra.mxu0 %v676
      %700 = vmatmul.bf16.gmra.mxu0 %v626
      %v701 = vpop.f32.mrf.mxu0
      %v702 = vadd.f32 0.0, %v701
      %v703 = vpop.f32.mrf.mxu0
      %704 = vdwg.mxu0
      %v721 = vunpack.c.l.b16 %v592
      %v722 = vunpack.c.l.b16 %v593
      %v723 = vunpack.c.l.b16 %v594
      %v724 = vunpack.c.l.b16 %v595
      %v725 = vunpack.c.l.b16 %v596
      %v726 = vunpack.c.l.b16 %v597
      %v727 = vunpack.c.l.b16 %v598
      %v728 = vunpack.c.l.b16 %v599
      %v729 = vunpack.c.l.b16 %v600
      %v730 = vunpack.c.l.b16 %v601
      %v731 = vunpack.c.l.b16 %v602
      %v732 = vunpack.c.l.b16 %v603
      %v733 = vunpack.c.l.b16 %v604
      %v734 = vunpack.c.l.b16 %v605
      %v735 = vunpack.c.l.b16 %v606
      %v736 = vunpack.c.l.b16 %v607
      %v737 = vpack.c.b16 %v722, %v721
      %v738 = vpack.c.b16 %v724, %v723
      %v739 = vpack.c.b16 %v726, %v725
      %v740 = vpack.c.b16 %v728, %v727
      %v741 = vpack.c.b16 %v730, %v729
      %v742 = vpack.c.b16 %v732, %v731
      %v743 = vpack.c.b16 %v734, %v733
      %v744 = vpack.c.b16 %v736, %v735
      %753 = vmatpush.bf16.msra.mxu0 %v744
      %754 = vmatpush.bf16.msra.mxu0 %v743
      %755 = vmatpush.bf16.msra.mxu0 %v742
      %756 = vmatpush.bf16.msra.mxu0 %v741
      %757 = vmatpush.bf16.msra.mxu0 %v740
      %758 = vmatpush.bf16.msra.mxu0 %v739
      %759 = vmatpush.bf16.msra.mxu0 %v738
      %760 = vmatpush.bf16.msra.mxu0 %v737
      %761 = vmatmul.bf16.gmra.mxu0 %v591
      %v762 = vpop.f32.mrf.mxu0
      %v763 = vadd.f32 %v702, %v762
      %v764 = vpop.f32.mrf.mxu0
      %765 = vdwg.mxu0
      %s766 = scalar_lea.vmem %s4, 8
      %v767 = vld [vmem:[%s766] sm:$0xf]
      %v769 = vsel %vm342, %v767, 0
      %771 = vmatpush.bf16.msra.mxu0 0
      %772 = vmatpush.bf16.msra.mxu0 0
      %773 = vmatpush.bf16.msra.mxu0 0
      %774 = vmatpush.bf16.msra.mxu0 0
      %775 = vmatpush.bf16.msra.mxu0 0
      %776 = vmatpush.bf16.msra.mxu0 0
      %777 = vmatpush.bf16.msra.mxu0 0
      %778 = vmatpush.bf16.msra.mxu0 %v573
      %779 = vmatmul.bf16.gmra.mxu0 %v769
      %v780 = vpop.f32.mrf.mxu0
      %v781 = vadd.f32 0.0, %v780
      %v782 = vpop.f32.mrf.mxu0
      %783 = vdwg.mxu0
      %v784 = vpack.c.bf16 %v781, %v781
      %s785 = scalar_lea.vmem %s5, 128
      %v786 = vld [vmem:[%s785] sm:$0xf]
      %v787 = vld [vmem:[%s785 + $0x4] sm:$0xf]
      %v788 = vld [vmem:[%s785 + $0x8] sm:$0xf]
      %v789 = vld [vmem:[%s785 + $0xc] sm:$0xf]
      %v790 = vld [vmem:[%s785 + $0x10] sm:$0xf]
      %v791 = vld [vmem:[%s785 + $0x14] sm:$0xf]
      %v792 = vld [vmem:[%s785 + $0x18] sm:$0xf]
      %v793 = vld [vmem:[%s785 + $0x1c] sm:$0xf]
      %v794 = vld [vmem:[%s785 + $0x20] sm:$0xf]
      %v795 = vld [vmem:[%s785 + $0x24] sm:$0xf]
      %v796 = vld [vmem:[%s785 + $0x28] sm:$0xf]
      %v797 = vld [vmem:[%s785 + $0x2c] sm:$0xf]
      %v798 = vld [vmem:[%s785 + $0x30] sm:$0xf]
      %v799 = vld [vmem:[%s785 + $0x34] sm:$0xf]
      %v800 = vld [vmem:[%s785 + $0x38] sm:$0xf]
      %v801 = vld [vmem:[%s785 + $0x3c] sm:$0xf]
      %v818 = vunpack.c.l.b16 %v786
      %v819 = vunpack.c.l.b16 %v787
      %v820 = vunpack.c.l.b16 %v788
      %v821 = vunpack.c.l.b16 %v789
      %v822 = vunpack.c.l.b16 %v790
      %v823 = vunpack.c.l.b16 %v791
      %v824 = vunpack.c.l.b16 %v792
      %v825 = vunpack.c.l.b16 %v793
      %v826 = vunpack.c.l.b16 %v794
      %v827 = vunpack.c.l.b16 %v795
      %v828 = vunpack.c.l.b16 %v796
      %v829 = vunpack.c.l.b16 %v797
      %v830 = vunpack.c.l.b16 %v798
      %v831 = vunpack.c.l.b16 %v799
      %v832 = vunpack.c.l.b16 %v800
      %v833 = vunpack.c.l.b16 %v801
      %v834 = vpack.c.b16 %v819, %v818
      %v835 = vpack.c.b16 %v821, %v820
      %v836 = vpack.c.b16 %v823, %v822
      %v837 = vpack.c.b16 %v825, %v824
      %v838 = vpack.c.b16 %v827, %v826
      %v839 = vpack.c.b16 %v829, %v828
      %v840 = vpack.c.b16 %v831, %v830
      %v841 = vpack.c.b16 %v833, %v832
      %850 = vmatpush.bf16.msra.mxu0 %v841
      %851 = vmatpush.bf16.msra.mxu0 %v840
      %852 = vmatpush.bf16.msra.mxu0 %v839
      %853 = vmatpush.bf16.msra.mxu0 %v838
      %854 = vmatpush.bf16.msra.mxu0 %v837
      %855 = vmatpush.bf16.msra.mxu0 %v836
      %856 = vmatpush.bf16.msra.mxu0 %v835
      %857 = vmatpush.bf16.msra.mxu0 %v834
      %858 = vmatmul.bf16.gmra.mxu0 %v784
      %v859 = vpop.f32.mrf.mxu0
      %v860 = vadd.f32 0.0, %v859
      %v861 = vpop.f32.mrf.mxu0
      %862 = vdwg.mxu0
      %v863 = vadd.f32 %v763, %v860
      %v864 = vld [vmem:[%s6] sm:$0x1]
      %v866 = vperm.slane %v864, 0
      %v868 = vadd.f32 %v863, %v866
      %v869 = vld [vmem:[%s7] sm:$0xf]
      %v871 = vsel %vm342, %v869, 0
      %873 = vmatpush.bf16.msra.mxu0 0
      %874 = vmatpush.bf16.msra.mxu0 0
      %875 = vmatpush.bf16.msra.mxu0 0
      %876 = vmatpush.bf16.msra.mxu0 0
      %877 = vmatpush.bf16.msra.mxu0 0
      %878 = vmatpush.bf16.msra.mxu0 0
      %879 = vmatpush.bf16.msra.mxu0 0
      %880 = vmatpush.bf16.msra.mxu0 %v334
      %881 = vmatmul.bf16.gmra.mxu0 %v871
      %v882 = vpop.f32.mrf.mxu0
      %v883 = vadd.f32 0.0, %v882
      %v884 = vpop.f32.mrf.mxu0
      %885 = vdwg.mxu0
      %v886 = vpack.c.bf16 %v883, %v883
      %v887 = vld [vmem:[%s8] sm:$0xf]
      %v888 = vld [vmem:[%s8 + $0x4] sm:$0xf]
      %v889 = vld [vmem:[%s8 + $0x8] sm:$0xf]
      %v890 = vld [vmem:[%s8 + $0xc] sm:$0xf]
      %v891 = vld [vmem:[%s8 + $0x10] sm:$0xf]
      %v892 = vld [vmem:[%s8 + $0x14] sm:$0xf]
      %v893 = vld [vmem:[%s8 + $0x18] sm:$0xf]
      %v894 = vld [vmem:[%s8 + $0x1c] sm:$0xf]
      %v903 = vunpack.c.l.b16 %v887
      %v904 = vunpack.c.l.b16 %v888
      %v905 = vunpack.c.l.b16 %v889
      %v906 = vunpack.c.l.b16 %v890
      %v907 = vunpack.c.l.b16 %v891
      %v908 = vunpack.c.l.b16 %v892
      %v909 = vunpack.c.l.b16 %v893
      %v910 = vunpack.c.l.b16 %v894
      %v911 = vpack.c.b16 %v904, %v903
      %v912 = vpack.c.b16 %v906, %v905
      %v913 = vpack.c.b16 %v908, %v907
      %v914 = vpack.c.b16 %v910, %v909
      %v920 = vsel %vm428, %v886, 0
      %922 = vmatpush.bf16.msra.mxu0 0
      %923 = vmatpush.bf16.msra.mxu0 0
      %924 = vmatpush.bf16.msra.mxu0 0
      %925 = vmatpush.bf16.msra.mxu0 0
      %926 = vmatpush.bf16.msra.mxu0 %v914
      %927 = vmatpush.bf16.msra.mxu0 %v913
      %928 = vmatpush.bf16.msra.mxu0 %v912
      %929 = vmatpush.bf16.msra.mxu0 %v911
      %930 = vmatmul.bf16.gmra.mxu0 %v920
      %v931 = vpop.f32.mrf.mxu0
      %v932 = vadd.f32 0.0, %v931
      %v933 = vpop.f32.mrf.mxu0
      %934 = vdwg.mxu0
      %v935 = vadd.f32 %v868, %v932
      %v936 = vmax.f32 %v935, 0.0
      %937 = vst.msk [vmem:[%s330] sm:$0xff] %vm428, %v936
      %p938 = scmp.lt.s32.totalorder %s20, 1
      %s939 = scalar_select %p938, %s20, 1
      %s940 = smul.addr %s939, 8
      %s941 = scalar_lea.vmem %s9, %s940
      // Predicated region
      $region57: #{basic_block_forward.1} parent=55 // pred_check
        %p942 = pneg %p232
      $region58: #{basic_block_forward.1} parent=55 // pred_check_branch
        %944 = sbr.rel (%p942) target = $region60
      $region59: #{basic_block_forward.1} parent=55 // pred_region
        _
      $region60: #{basic_block_forward.1} parent=55 // pred_fallthru
        _
    $region56: #{basic_block_forward.1} parent=5 // pred_fallthru
      _
    %p945 = scmp.le.s32.totalorder 2, %s15
    // Predicated region
    $region61: #{basic_block_forward.1} parent=5 // pred_check
      %p946 = pneg %p945
    $region62: #{basic_block_forward.1} parent=5 // pred_check_branch
      %948 = sbr.rel (%p946) target = $region64
    $region63: #{basic_block_forward.1} parent=5 // pred_region
      %s949 = ssub.s32 %s15, 2
      // Predicated region
      $region65: #{basic_block_forward.1} parent=63 // pred_check
        %p950 = pneg %p238
      $region66: #{basic_block_forward.1} parent=63 // pred_check_branch
        %952 = sbr.rel (%p950) target = $region68
      $region67: #{basic_block_forward.1} parent=63 // pred_region
        %p953 = scmp.lt.s32.totalorder %s21, 1
        %s954 = scalar_select %p953, %s21, 1
        %s955 = smul.addr %s954, 8
        %s956 = scalar_lea.vmem %s9, %s955
      $region68: #{basic_block_forward.1} parent=63 // pred_fallthru
        _
    $region64: #{basic_block_forward.1} parent=5 // pred_fallthru
      _
  $region6: #{basic_block_forward.1} parent=0 // loop_footer
    %s19 = sadd.s32 1, %s15
  $region7: #{basic_block_forward.1} parent=0 // loop_footer_branch
    %14 = sbr.rel target = $region3
  $region8: #{basic_block_forward.1} parent=0 // loop_exit
    _

</llo_original>
